<compile_context>
chip_gen: v7x
topology: tpu7x:2x2x1
jax: 0.10.0
libtpu: 0.0.40
codegen_flags: <defaults>
</compile_context>

<pallas_src>
import functools

import jax
import jax.numpy as jnp
from jax.experimental import pallas as pl
from jax.experimental.pallas import tpu as pltpu

_LANES = 128
_MIN_TILE_ROWS = 32      # int8 sublane tile (also covers bf16's 16 and f32's 8)
_MAX_TILE_ROWS = 8192    # (8192,128) f32 tile = 4 MiB (+1 MiB int8), 2x-buffered ~10 MiB


def _cdiv(a, b):
    return -(-a // b)


def _bce_kernel(x_ref, m_ref, out_ref, acc_ref, *, pw0, pw1, inv_count,
                total, tile_rows, tiles_per_split, needs_mask):
    """One (TM, 128) lane-dense tile of the flattened BCE-with-logits loss."""
    i = pl.program_id(1)                       # inner reduction axis

    @pl.when(i == 0)
    def _init():
        acc_ref[...] = jnp.zeros_like(acc_ref)

    x = x_ref[...].astype(jnp.float32)         # (TM, 128) logits, native dtype in HBM
    y = m_ref[...].astype(jnp.float32)         # (TM, 128) one-hot target in {0, 1}

    tm = x.shape[0]
    lane = jax.lax.broadcasted_iota(jnp.int32, (tm, _LANES), 1)

    # class index of flattened element k is k % 2 == lane parity (128 is even);
    # algebraic pos_weight selection: pw - 1 = (pw0-1) + (pw1-pw0)*parity.
    parity = (lane & 1).astype(jnp.float32)
    a = (pw0 - 1.0) + (pw1 - pw0) * parity

    # stable BCE-with-logits:
    #   softplus(-x) = max(-x, 0) + log1p(exp(-|x|))
    #   loss = pw*y*softplus(-x) + (1-y)*softplus(x)
    #        = (1 + (pw-1)*y) * softplus(-x) + (1-y)*x
    sp = jnp.maximum(-x, 0.0) + jnp.log1p(jnp.exp(-jnp.abs(x)))
    loss = (1.0 + a * y) * sp + (1.0 - y) * x

    if needs_mask:
        # Ragged tail / non-dividing last tile: mask by global flat index.
        block = pl.program_id(0) * tiles_per_split + i
        row = jax.lax.broadcasted_iota(jnp.int32, (tm, _LANES), 0)
        flat = (block * tile_rows + row) * _LANES + lane
        loss = jnp.where(flat < total, loss, 0.0)

    # (32,128) accumulator = 4 independent (8,128) vregs -> 4 interleaved
    # accumulation chains; pure VPU adds per step.
    acc_ref[...] += loss.reshape(tm // _MIN_TILE_ROWS, _MIN_TILE_ROWS, _LANES).sum(axis=0)

    # Cross-lane reduce + scale only once per split, on the last grid step.
    @pl.when(i == pl.num_programs(1) - 1)
    def _finalize():
        out_ref[0, 0] = jnp.sum(acc_ref[...]) * inv_count


def my_bce_with_logits_loss(logits, targets, pos_weight=(1.0, 2.4)):
    """logits: (N, 2) float (f32 or bf16), targets: (N,) int class ids.

    Returns the scalar mean BCE-with-logits loss with per-class pos_weight,
    matching torch.nn.BCEWithLogitsLoss(pos_weight=pos_weight) applied to the
    scatter_-built one-hot mask.
    """
    n, c = logits.shape
    if c != 2:
        raise ValueError("lane-parity pos_weight selection assumes 2 classes")
    total = n * c

    # One-hot class mask (== cls_mask.scatter_(1, ids, 1)); int8 = 1 B/elem of
    # HBM traffic, built in a single fused elementwise pass.
    # TODO(synk): bit-packing this to 1 bit/elem needs a cross-lane unpack in
    # the kernel; skipped to keep the lowering simple.
    onehot = (targets.astype(jnp.int32)[:, None]
              == jnp.arange(c, dtype=jnp.int32)[None, :]).astype(jnp.int8)

    # Lane-dense flattening (row-major), native logits dtype (no f32 upcast).
    flat_x = logits.reshape(-1)
    flat_m = onehot.reshape(-1)

    rows = _cdiv(total, _LANES)
    if rows < _MIN_TILE_ROWS:
        rows = _MIN_TILE_ROWS                      # tiny input: padding is negligible
    padded_total = rows * _LANES
    pad = padded_total - total
    if pad:
        # Only the <= (32*128)-element remainder is padded; aligned inputs
        # (total % 128 == 0, rows >= 32) skip this entirely (zero extra passes).
        flat_x = jnp.pad(flat_x, (0, pad))
        flat_m = jnp.pad(flat_m, (0, pad))
    x2d = flat_x.reshape(rows, _LANES)
    m2d = flat_m.reshape(rows, _LANES)

    # Tiling geometry: biggest 32-row-aligned tile that fits, no array padding
    # to tile multiples (the last tile may run past the array; masked in-kernel).
    tile_rows = min(_MAX_TILE_ROWS, (rows // _MIN_TILE_ROWS) * _MIN_TILE_ROWS)
    total_tiles = _cdiv(rows, tile_rows)

    # 2-way split -> both TensorCores on v7x; only when it divides evenly so no
    # duplicate/out-of-range tiles are ever generated. Harmless on 1-TC chips.
    # TODO(synk): verify on v7x xprof that "parallel" shards across both TCs;
    # switch to pltpu.CORE_PARALLEL if only one TC is busy.
    num_splits = 2 if (total_tiles >= 2 and total_tiles % 2 == 0) else 1
    tiles_per_split = total_tiles // num_splits

    needs_mask = (padded_total != total) or (rows % tile_rows != 0)

    kernel = functools.partial(
        _bce_kernel,
        pw0=float(pos_weight[0]),
        pw1=float(pos_weight[1]),
        inv_count=1.0 / float(total),
        total=total,
        tile_rows=tile_rows,
        tiles_per_split=tiles_per_split,
        needs_mask=needs_mask,
    )

    partials = pl.pallas_call(
        kernel,
        out_shape=jax.ShapeDtypeStruct((num_splits, 1), jnp.float32),
        grid=(num_splits, tiles_per_split),
        in_specs=[
            pl.BlockSpec((tile_rows, _LANES),
                         lambda s, i: (s * tiles_per_split + i, 0)),
            pl.BlockSpec((tile_rows, _LANES),
                         lambda s, i: (s * tiles_per_split + i, 0)),
        ],
        out_specs=pl.BlockSpec((1, 1), lambda s, i: (s, 0),
                               memory_space=pltpu.SMEM),
        scratch_shapes=[pltpu.VMEM((_MIN_TILE_ROWS, _LANES), jnp.float32)],
        compiler_params=pltpu.CompilerParams(
            dimension_semantics=("parallel", "arbitrary")),
    )(x2d, m2d)

    # Each partial already carries the 1/(N*C) factor; summing gives the mean.
    return jnp.sum(partials)


if __name__ == "__main__":
    key = jax.random.PRNGKey(0)
    k1, k2 = jax.random.split(key)

    N, C = 16, 2  # batch of 16, 2 classes (pos_weight has 2 entries)
    logits = jax.random.normal(k1, (N, C), dtype=jnp.float32)
    targets = jax.random.randint(k2, (N,), 0, C, dtype=jnp.int32)
    pos_weight = (1.0, 2.4)  # self.w in the PyTorch module

    loss = my_bce_with_logits_loss(logits, targets, pos_weight)
    jax.block_until_ready(loss)

    # Pure-JAX reference (standard stable BCEWithLogitsLoss with pos_weight).
    y_ref = jax.nn.one_hot(targets, C, dtype=jnp.float32)
    pw = jnp.array(pos_weight, dtype=jnp.float32)
    log1pexp = jnp.log1p(jnp.exp(-jnp.abs(logits)))
    sp_pos = jnp.maximum(-logits, 0.0) + log1pexp      # softplus(-x)
    sp_neg = jnp.maximum(logits, 0.0) + log1pexp       # softplus(x)
    ref = jnp.mean(pw[None, :] * y_ref * sp_pos + (1.0 - y_ref) * sp_neg)

    assert jnp.allclose(loss, ref, atol=1e-5, rtol=1e-5), (loss, ref)
    print("KERNEL_OK")
</pallas_src>

<mosaic_0001>
module attributes {stable_mosaic.version = 11 : i64} {
  func.func @_bce_kernel(%arg0: i32, %arg1: i32, %arg2: memref<32x128xf32, #tpu.memory_space<vmem>>, %arg3: memref<32x128xi8, #tpu.memory_space<vmem>>, %arg4: memref<1x1xf32, #tpu.memory_space<smem>>, %arg5: memref<32x128xf32, #tpu.memory_space<vmem>>) attributes {dimension_semantics = [#tpu.dimension_semantics<parallel>, #tpu.dimension_semantics<arbitrary>], iteration_bounds = array<i64: 1, 1>, scalar_prefetch = 0 : i64, scratch_operands = 1 : i64, tpu.core_type = #tpu.core_type<tc>, window_params = [{transform_indices = @transform_0, window_bounds = array<i64: 32, 128>}, {transform_indices = @transform_1, window_bounds = array<i64: 32, 128>}, {transform_indices = @transform_2, window_bounds = array<i64: 1, 1>}]} {
    %c0_i32 = arith.constant 0 : i32
    %0 = arith.cmpi eq, %arg1, %c0_i32 : i32
    %1 = arith.extui %0 : i1 to i32
    %c0_i32_0 = arith.constant 0 : i32
    %2 = arith.cmpi ne, %1, %c0_i32_0 : i32
    scf.if %2 {
      %cst_20 = arith.constant 0.000000e+00 : f32
      %53 = vector.broadcast %cst_20 : f32 to vector<32x128xf32>
      %c0_21 = arith.constant 0 : index
      %c0_22 = arith.constant 0 : index
      %54 = vector.load %arg5[%c0_21, %c0_22] : memref<32x128xf32, #tpu.memory_space<vmem>>, vector<32x128xf32>
      tpu.vector_store %arg5[%c0_21, %c0_22], %53 {strides = array<i32>} : memref<32x128xf32, #tpu.memory_space<vmem>>, vector<32x128xf32>,
    } else {
    }
    %c0 = arith.constant 0 : index
    %c0_1 = arith.constant 0 : index
    %3 = vector.load %arg2[%c0, %c0_1] : memref<32x128xf32, #tpu.memory_space<vmem>>, vector<32x128xf32>
    %c0_2 = arith.constant 0 : index
    %c0_3 = arith.constant 0 : index
    %4 = vector.load %arg3[%c0_2, %c0_3] : memref<32x128xi8, #tpu.memory_space<vmem>>, vector<32x128xi8>
    %5 = arith.sitofp %4 : vector<32x128xi8> to vector<32x128xf32>
    %6 = tpu.iota {dimensions = array<i32: 1>} : vector<32x128xi32>
    %c1_i32 = arith.constant 1 : i32
    %7 = vector.broadcast %c1_i32 : i32 to vector<32x128xi32>
    %8 = arith.andi %6, %7 : vector<32x128xi32>
    %9 = arith.sitofp %8 : vector<32x128xi32> to vector<32x128xf32>
    %cst = arith.constant 1.400000e+00 : f32
    %10 = vector.broadcast %cst : f32 to vector<32x128xf32>
    %11 = arith.mulf %10, %9 : vector<32x128xf32>
    %cst_4 = arith.constant 0.000000e+00 : f32
    %12 = vector.broadcast %cst_4 : f32 to vector<32x128xf32>
    %13 = arith.addf %12, %11 : vector<32x128xf32>
    %cst_5 = arith.constant 0.000000e+00 : f32
    %14 = vector.broadcast %cst_5 : f32 to vector<32x128xf32>
    %15 = arith.subf %14, %3 : vector<32x128xf32>
    %cst_6 = arith.constant 0.000000e+00 : f32
    %16 = vector.broadcast %cst_6 : f32 to vector<32x128xf32>
    %17 = arith.maximumf %15, %16 : vector<32x128xf32>
    %18 = math.absf %3 : vector<32x128xf32>
    %cst_7 = arith.constant 0.000000e+00 : f32
    %19 = vector.broadcast %cst_7 : f32 to vector<32x128xf32>
    %20 = arith.subf %19, %18 : vector<32x128xf32>
    %21 = math.exp %20 : vector<32x128xf32>
    %22 = math.log1p %21 : vector<32x128xf32>
    %23 = arith.addf %17, %22 : vector<32x128xf32>
    %24 = arith.mulf %13, %5 : vector<32x128xf32>
    %cst_8 = arith.constant 1.000000e+00 : f32
    %25 = vector.broadcast %cst_8 : f32 to vector<32x128xf32>
    %26 = arith.addf %25, %24 : vector<32x128xf32>
    %27 = arith.mulf %26, %23 : vector<32x128xf32>
    %cst_9 = arith.constant 1.000000e+00 : f32
    %28 = vector.broadcast %cst_9 : f32 to vector<32x128xf32>
    %29 = arith.subf %28, %5 : vector<32x128xf32>
    %30 = arith.mulf %29, %3 : vector<32x128xf32>
    %31 = arith.addf %27, %30 : vector<32x128xf32>
    %c1_i32_10 = arith.constant 1 : i32
    %32 = arith.muli %arg0, %c1_i32_10 : i32
    %33 = arith.addi %32, %arg1 : i32
    %34 = tpu.iota {dimensions = array<i32: 0>} : vector<32x128xi32>
    %c32_i32 = arith.constant 32 : i32
    %35 = arith.muli %33, %c32_i32 : i32
    %36 = vector.broadcast %35 : i32 to vector<32x128xi32>
    %37 = arith.addi %36, %34 : vector<32x128xi32>
    %c128_i32 = arith.constant 128 : i32
    %38 = vector.broadcast %c128_i32 : i32 to vector<32x128xi32>
    %39 = arith.muli %37, %38 : vector<32x128xi32>
    %40 = arith.addi %39, %6 : vector<32x128xi32>
    %c32_i32_11 = arith.constant 32 : i32
    %41 = vector.broadcast %c32_i32_11 : i32 to vector<32x128xi32>
    %42 = arith.cmpi slt, %40, %41 : vector<32x128xi32>
    %cst_12 = arith.constant 0.000000e+00 : f32
    %43 = vector.broadcast %cst_12 : f32 to vector<32x128xf32>
    %44 = arith.select %42, %31, %43 : vector<32x128xi1>, vector<32x128xf32>
    %c0_13 = arith.constant 0 : index
    %c0_14 = arith.constant 0 : index
    %45 = vector.load %arg5[%c0_13, %c0_14] : memref<32x128xf32, #tpu.memory_space<vmem>>, vector<32x128xf32>
    %46 = vector.shape_cast %44 : vector<32x128xf32> to vector<1x32x128xf32>
    %cst_15 = arith.constant dense<0.000000e+00> : vector<32x128xf32>
    %47 = vector.multi_reduction <add>, %46, %cst_15 [0] : vector<1x32x128xf32> to vector<32x128xf32>
    %48 = arith.addf %45, %47 : vector<32x128xf32>
    %c0_16 = arith.constant 0 : index
    %c0_17 = arith.constant 0 : index
    %49 = vector.load %arg5[%c0_16, %c0_17] : memref<32x128xf32, #tpu.memory_space<vmem>>, vector<32x128xf32>
    tpu.vector_store %arg5[%c0_16, %c0_17], %48 {strides = array<i32>} : memref<32x128xf32, #tpu.memory_space<vmem>>, vector<32x128xf32>,
    %c0_i32_18 = arith.constant 0 : i32
    %50 = arith.cmpi eq, %arg1, %c0_i32_18 : i32
    %51 = arith.extui %50 : i1 to i32
    %c0_i32_19 = arith.constant 0 : i32
    %52 = arith.cmpi ne, %51, %c0_i32_19 : i32
    scf.if %52 {
      %c0_20 = arith.constant 0 : index
      %c0_21 = arith.constant 0 : index
      %53 = vector.load %arg5[%c0_20, %c0_21] : memref<32x128xf32, #tpu.memory_space<vmem>>, vector<32x128xf32>
      %54 = vector.shape_cast %53 : vector<32x128xf32> to vector<1x32x128xf32>
      %cst_22 = arith.constant dense<0.000000e+00> : vector<1xf32>
      %55 = vector.multi_reduction <add>, %54, %cst_22 [1, 2] : vector<1x32x128xf32> to vector<1xf32>
      %56 = vector.shape_cast %55 : vector<1xf32> to vector<1x1x1xf32>
      %57 = vector.extract %56[0, 0, 0] : f32 from vector<1x1x1xf32>
      %cst_23 = arith.constant 3.125000e-02 : f32
      %58 = arith.mulf %57, %cst_23 : f32
      %c0_24 = arith.constant 0 : index
      %c0_25 = arith.constant 0 : index
      %59 = memref.load %arg4[%c0_24, %c0_25] : memref<1x1xf32, #tpu.memory_space<smem>>
      memref.store %58, %arg4[%c0_24, %c0_25] : memref<1x1xf32, #tpu.memory_space<smem>>
    } else {
    }
    return
  }
  func.func @transform_0(%arg0: i32, %arg1: i32) -> (i32, i32) {
    %c1_i32 = arith.constant 1 : i32
    %0 = arith.muli %arg0, %c1_i32 : i32
    %1 = arith.addi %0, %arg1 : i32
    %c0_i32 = arith.constant 0 : i32
    %c0_i32_0 = arith.constant 0 : i32
    return %1, %c0_i32 : i32, i32
  }
  func.func @transform_1(%arg0: i32, %arg1: i32) -> (i32, i32) {
    %c1_i32 = arith.constant 1 : i32
    %0 = arith.muli %arg0, %c1_i32 : i32
    %1 = arith.addi %0, %arg1 : i32
    %c0_i32 = arith.constant 0 : i32
    %c0_i32_0 = arith.constant 0 : i32
    return %1, %c0_i32 : i32, i32
  }
  func.func @transform_2(%arg0: i32, %arg1: i32) -> (i32, i32) {
    %c0_i32 = arith.constant 0 : i32
    %c0_i32_0 = arith.constant 0 : i32
    return %arg0, %c0_i32 : i32, i32
  }
}

</mosaic_0001>

<llo_original>
// kernel: tpu_custom_call.1
$region0: #{tpu_custom_call.1}
  #allocation0 [shape = 'u32[]', space=smem, size = 0x4, offset = 0x4, fixed_abs, tag = 'smem constant byte address 0x4 - core index']
  #allocation1 [shape = 'u32[144,128]{1,0:T(1,128)}', space=vmem, size = 0x12000, scoped, tag = 'internal scratch']
  #allocation2 [shape = 'f32[32,128]{1,0:T(8,128)}', space=vmem, size = 0x4000, scoped, tag = 'scratch operand']
  %s0 = inlined_call_operand.hbm [shape: f32[32,128], index: 0, kind: input, shape index: {}]
  %s1 = inlined_call_operand.hbm [shape: s8[32,128], index: 1, kind: input, shape index: {}]
  %s2 = inlined_call_operand.hbm [shape: f32[1,1], index: 2, kind: output, shape index: {}]
  %s3 = sld [smem:[#allocation0]]
  $region34: #{tpu_custom_call.1} parent=0
    _
  %s5 = ssub.s32 1, %s3
  %s6 = scalar_select 0, %s5, %s3
  $region1: #{tpu_custom_call.1} parent=0
    #allocation3 [shape = 'u8[16384]{0}', space=vmem, size = 0x4000, scoped, tag = 'input window, operand 0, single buffered']
    #allocation4 [shape = 's32[1]{0}', space=sflag, size = 0x4, scoped, tag = 'scoped memory for tpu_custom_call.1']
    #allocation5 [shape = 's32[1]{0}', space=sflag, size = 0x4, scoped, tag = 'scoped memory for tpu_custom_call.1']
    #allocation6 [shape = 'u8[4096]{0}', space=vmem, size = 0x1000, scoped, tag = 'input window, operand 1, single buffered']
    #allocation7 [shape = 's32[1]{0}', space=sflag, size = 0x4, scoped, tag = 'scoped memory for tpu_custom_call.1']
    #allocation8 [shape = 'u8[512]{0}', space=smem, size = 0x200, scoped, tag = 'output window, operand 0, single buffered']
    %7 = vsyncpa [#allocation4], 0
    %8 = vsyncpa [#allocation7], 0
    %9 = vsyncpa [#allocation5], 0
    // Predicated region
    $region2: #{tpu_custom_call.1} parent=1 // pred_check
      _
    $region3: #{tpu_custom_call.1} parent=1 // pred_check_branch
      %11 = sbr.rel (0) target = $region5
    $region4: #{tpu_custom_call.1} parent=1 // pred_region
      %s12 = sadd.s32 0, 0
      %s13 = smul.u32 4, %s12
      %s15 = ssub.s32 512, 512
      %16 = vsyncadd [#allocation4], %s15
      %s17 = smul.addr %s13, 128
      %s18 = scalar_lea.hbm %s0, %s17
      %s19 = sshll.u32 [#allocation3], 4
      %s20 = int_to_ptr.vmem [resolvable:$true] %s19
      %25 = dma.hbm_to_vmem [thread:$0]  %s18, 512, %s20, [#allocation4], 128, 128, 8
    $region5: #{tpu_custom_call.1} parent=1 // pred_fallthru
      _
    // Predicated region
    $region6: #{tpu_custom_call.1} parent=1 // pred_check
      _
    $region7: #{tpu_custom_call.1} parent=1 // pred_check_branch
      %27 = sbr.rel (0) target = $region9
    $region8: #{tpu_custom_call.1} parent=1 // pred_region
      %s28 = sadd.s32 0, 0
      %s30 = ssub.s32 128, 128
      %31 = vsyncadd [#allocation7], %s30
      %s32 = smul.addr %s28, 128
      %s33 = scalar_lea.hbm %s1, %s32
      %s35 = sshll.u32 [#allocation6], 4
      %s36 = int_to_ptr.vmem [resolvable:$true] %s35
      %38 = dma.hbm_to_vmem [thread:$0]  %s33, 128, %s36, [#allocation7]
    $region9: #{tpu_custom_call.1} parent=1 // pred_fallthru
      _
    // Predicated region
    $region10: #{tpu_custom_call.1} parent=1 // pred_check
      _
    $region11: #{tpu_custom_call.1} parent=1 // pred_check_branch
      %40 = sbr.rel (0) target = $region13
    $region12: #{tpu_custom_call.1} parent=1 // pred_region
      %41 = dma.done [#allocation4], 512
    $region13: #{tpu_custom_call.1} parent=1 // pred_fallthru
      _
    // Predicated region
    $region14: #{tpu_custom_call.1} parent=1 // pred_check
      _
    $region15: #{tpu_custom_call.1} parent=1 // pred_check_branch
      %43 = sbr.rel (0) target = $region17
    $region16: #{tpu_custom_call.1} parent=1 // pred_region
      %44 = dma.done [#allocation7], 128
    $region17: #{tpu_custom_call.1} parent=1 // pred_fallthru
      _
    %s45 = sadd.s32 0, 0
    %s46 = smul.u32 4, %s45
    %s47 = sadd.s32 0, 0
    %p48 = scmp.eq.s32.totalorder 0, 0
    // Predicated region
    $region18: #{tpu_custom_call.1} parent=1 // pred_check
      %p49 = pneg %p48
    $region19: #{tpu_custom_call.1} parent=1 // pred_check_branch
      %51 = sbr.rel (%p49) target = $region21
    $region20: #{tpu_custom_call.1} parent=1 // pred_region
      %52 = vst [vmem:[#allocation2] sm:$0xff] 0.0
      %53 = vst [vmem:[#allocation2 + $0x8] sm:$0xff] 0.0
      %54 = vst [vmem:[#allocation2 + $0x10] sm:$0xff] 0.0
      %55 = vst [vmem:[#allocation2 + $0x18] sm:$0xff] 0.0
    $region21: #{tpu_custom_call.1} parent=1 // pred_fallthru
      _
    %v56 = vld [vmem:[#allocation3] sm:$0xff]
    %v57 = vld [vmem:[#allocation3 + $0x8] sm:$0xff]
    %v58 = vld [vmem:[#allocation3 + $0x10] sm:$0xff]
    %v59 = vld [vmem:[#allocation3 + $0x18] sm:$0xff]
    %v60 = vld [vmem:[#allocation6] sm:$0xff]
    %v61 = vunpack.c.0.s8 %v60
    %v62 = vunpack.c.1.s8 %v60
    %v63 = vunpack.c.2.s8 %v60
    %v64 = vunpack.c.3.s8 %v60
    %v65 = vcvt.s32.f32 %v61
    %v66 = vcvt.s32.f32 %v62
    %v67 = vcvt.s32.f32 %v63
    %v68 = vcvt.s32.f32 %v64
    %v69 = vlaneseq
    %v70 = vand.u32 %v69, 127
    %v71 = vand.u32 %v70, 1
    %v72 = vcvt.s32.f32 %v71
    %v73 = vmul.f32 %v72, 1.4
    %v74 = vadd.f32 %v73, 0.0
    %v75 = vsub.f32 0.0, %v56
    %v76 = vsub.f32 0.0, %v57
    %v77 = vsub.f32 0.0, %v58
    %v78 = vsub.f32 0.0, %v59
    %v79 = vmax.f32 %v75, 0.0
    %v80 = vmax.f32 %v76, 0.0
    %v81 = vmax.f32 %v77, 0.0
    %v82 = vmax.f32 %v78, 0.0
    %v83 = vand.u32 2147483647, %v56
    %v84 = vand.u32 2147483647, %v57
    %v85 = vand.u32 2147483647, %v58
    %v86 = vand.u32 2147483647, %v59
    %v87 = vsub.f32 0.0, %v83
    %v88 = vsub.f32 0.0, %v84
    %v89 = vsub.f32 0.0, %v85
    %v90 = vsub.f32 0.0, %v86
    %v91 = vmul.f32 %v87, 1.442695
    %v92 = vpow.pop %v91
    %v93 = vmul.f32 %v88, 1.442695
    %v94 = vpow.pop %v93
    %v95 = vmul.f32 %v89, 1.442695
    %v96 = vpow.pop %v95
    %v97 = vmul.f32 %v90, 1.442695
    %v98 = vpow.pop %v97
    %v99 = vadd.f32 %v92, 1.0
    %v100 = vlog2.pop %v99
    %v101 = vmul.f32 %v100, 0.6931472
    %v102 = vmul.f32 -0.5, %v92
    %v103 = vadd.f32 %v102, 1.0
    %v104 = vmul.f32 %v103, %v92
    %v105 = vand.u32 2147483647, %v92
    %vm106 = vcmp.lt.f32.partialorder %v105, 0.0004427343
    %v107 = vsel %vm106, %v104, %v101
    %v108 = vadd.f32 %v94, 1.0
    %v109 = vlog2.pop %v108
    %v110 = vmul.f32 %v109, 0.6931472
    %v111 = vmul.f32 -0.5, %v94
    %v112 = vadd.f32 %v111, 1.0
    %v113 = vmul.f32 %v112, %v94
    %v114 = vand.u32 2147483647, %v94
    %vm115 = vcmp.lt.f32.partialorder %v114, 0.0004427343
    %v116 = vsel %vm115, %v113, %v110
    %v117 = vadd.f32 %v96, 1.0
    %v118 = vlog2.pop %v117
    %v119 = vmul.f32 %v118, 0.6931472
    %v120 = vmul.f32 -0.5, %v96
    %v121 = vadd.f32 %v120, 1.0
    %v122 = vmul.f32 %v121, %v96
    %v123 = vand.u32 2147483647, %v96
    %vm124 = vcmp.lt.f32.partialorder %v123, 0.0004427343
    %v125 = vsel %vm124, %v122, %v119
    %v126 = vadd.f32 %v98, 1.0
    %v127 = vlog2.pop %v126
    %v128 = vmul.f32 %v127, 0.6931472
    %v129 = vmul.f32 -0.5, %v98
    %v130 = vadd.f32 %v129, 1.0
    %v131 = vmul.f32 %v130, %v98
    %v132 = vand.u32 2147483647, %v98
    %vm133 = vcmp.lt.f32.partialorder %v132, 0.0004427343
    %v134 = vsel %vm133, %v131, %v128
    %v135 = vadd.f32 %v79, %v107
    %v136 = vadd.f32 %v80, %v116
    %v137 = vadd.f32 %v81, %v125
    %v138 = vadd.f32 %v82, %v134
    %v139 = vmul.f32 %v74, %v65
    %v140 = vmul.f32 %v74, %v66
    %v141 = vmul.f32 %v74, %v67
    %v142 = vmul.f32 %v74, %v68
    %v143 = vadd.f32 %v139, 1.0
    %v144 = vadd.f32 %v140, 1.0
    %v145 = vadd.f32 %v141, 1.0
    %v146 = vadd.f32 %v142, 1.0
    %v147 = vmul.f32 %v143, %v135
    %v148 = vmul.f32 %v144, %v136
    %v149 = vmul.f32 %v145, %v137
    %v150 = vmul.f32 %v146, %v138
    %v151 = vsub.f32 1.0, %v65
    %v152 = vsub.f32 1.0, %v66
    %v153 = vsub.f32 1.0, %v67
    %v154 = vsub.f32 1.0, %v68
    %v155 = vmul.f32 %v151, %v56
    %v156 = vmul.f32 %v152, %v57
    %v157 = vmul.f32 %v153, %v58
    %v158 = vmul.f32 %v154, %v59
    %v159 = vadd.f32 %v147, %v155
    %v160 = vadd.f32 %v148, %v156
    %v161 = vadd.f32 %v149, %v157
    %v162 = vadd.f32 %v150, %v158
    %s163 = sadd.s32 0, 0
    %v164 = vlaneseq
    %v165 = vshrl.u32 %v164, 7
    %v166 = vadd.s32 %v165, 8
    %v167 = vadd.s32 %v165, 16
    %v168 = vadd.s32 %v165, 24
    %s169 = smul.u32 %s163, 32
    %v170 = vstv %s169
    %v171 = vadd.s32 %v170, %v165
    %v172 = vadd.s32 %v170, %v166
    %v173 = vadd.s32 %v170, %v167
    %v174 = vadd.s32 %v170, %v168
    %v175 = vmul.u32 %v171, 128
    %v176 = vmul.u32 %v172, 128
    %v177 = vmul.u32 %v173, 128
    %v178 = vmul.u32 %v174, 128
    %v179 = vadd.s32 %v175, %v70
    %v180 = vadd.s32 %v176, %v70
    %v181 = vadd.s32 %v177, %v70
    %v182 = vadd.s32 %v178, %v70
    %vm183 = vcmp.lt.s32.totalorder %v179, 32
    %vm184 = vcmp.lt.s32.totalorder %v180, 32
    %vm185 = vcmp.lt.s32.totalorder %v181, 32
    %vm186 = vcmp.lt.s32.totalorder %v182, 32
    %v187 = vsel %vm183, %v159, 0.0
    %v188 = vsel %vm184, %v160, 0.0
    %v189 = vsel %vm185, %v161, 0.0
    %v190 = vsel %vm186, %v162, 0.0
    %v191 = vld [vmem:[#allocation2] sm:$0xff]
    %v192 = vld [vmem:[#allocation2 + $0x8] sm:$0xff]
    %v193 = vld [vmem:[#allocation2 + $0x10] sm:$0xff]
    %v194 = vld [vmem:[#allocation2 + $0x18] sm:$0xff]
    %v195 = vadd.f32 %v187, 0.0
    %v196 = vadd.f32 %v188, 0.0
    %v197 = vadd.f32 %v189, 0.0
    %v198 = vadd.f32 %v190, 0.0
    %v199 = vadd.f32 %v191, %v195
    %v200 = vadd.f32 %v192, %v196
    %v201 = vadd.f32 %v193, %v197
    %v202 = vadd.f32 %v194, %v198
    %203 = vst [vmem:[#allocation2] sm:$0xff] %v199
    %204 = vst [vmem:[#allocation2 + $0x8] sm:$0xff] %v200
    %205 = vst [vmem:[#allocation2 + $0x10] sm:$0xff] %v201
    %206 = vst [vmem:[#allocation2 + $0x18] sm:$0xff] %v202
    // Predicated region
    $region22: #{tpu_custom_call.1} parent=1 // pred_check
      %p207 = pneg %p48
    $region23: #{tpu_custom_call.1} parent=1 // pred_check_branch
      %209 = sbr.rel (%p207) target = $region25
    $region24: #{tpu_custom_call.1} parent=1 // pred_region
      %v210 = vld [vmem:[#allocation2] sm:$0xff]
      %v211 = vld [vmem:[#allocation2 + $0x8] sm:$0xff]
      %v212 = vld [vmem:[#allocation2 + $0x10] sm:$0xff]
      %v213 = vld [vmem:[#allocation2 + $0x18] sm:$0xff]
      %v214 = vadd.f32 %v210, %v211
      %v215 = vadd.f32 %v214, %v212
      %v216 = vadd.f32 %v215, %v213
      %217 = vadd.xlane.f32.xlu0 %v216
      %v218 = vpop.xlane.xlu0 %217
      %v219 = vrot.slane %v218, 4
      %v220 = vadd.f32 %v218, %v219
      %v221 = vrot.slane %v220, 2
      %v222 = vadd.f32 %v220, %v221
      %v223 = vrot.slane %v222, 1
      %v224 = vadd.f32 %v222, %v223
      %s225 = vtos %v224
      %s226 = smul.f32 %s225, 0.03125
      %s227 = scalar_lea.smem [#allocation8], 0
      %228 = sst [smem:[%s227]] %s226
    $region25: #{tpu_custom_call.1} parent=1 // pred_fallthru
      _
    // Predicated region
    $region26: #{tpu_custom_call.1} parent=1 // pred_check
      _
    $region27: #{tpu_custom_call.1} parent=1 // pred_check_branch
      %230 = sbr.rel (0) target = $region29
    $region28: #{tpu_custom_call.1} parent=1 // pred_region
      %s232 = ssub.s32 16, 16
      %233 = vsyncadd [#allocation5], %s232
      %236 = dma.smem_to_hbm [#allocation8], 16, %s2, [#allocation5]
    $region29: #{tpu_custom_call.1} parent=1 // pred_fallthru
      _
    // Predicated region
    $region30: #{tpu_custom_call.1} parent=1 // pred_check
      _
    $region31: #{tpu_custom_call.1} parent=1 // pred_check_branch
      %238 = sbr.rel (0) target = $region33
    $region32: #{tpu_custom_call.1} parent=1 // pred_region
      %239 = dma.done [#allocation5], 16
    $region33: #{tpu_custom_call.1} parent=1 // pred_fallthru
      _
    %240 = sfence
    %241 = vsyncpa [#allocation4], 1
    %242 = vsyncpa [#allocation7], 1
    %243 = vsyncpa [#allocation5], 1

</llo_original>
